<compile_context>
chip_gen: v6e
topology: v6e:2x2x1
jax: 0.10.0
libtpu: 0.0.40
codegen_flags: <defaults>
</compile_context>

<pallas_src>
import functools
import math

import jax
import jax.numpy as jnp
from jax import lax
from jax.experimental import pallas as pl
from jax.experimental.pallas import tpu as pltpu

NUM_LANES = 128


def _pick_tile(total: int, target: int, multiple: int) -> int:
    """Largest divisor of `total` <= target that is a multiple of `multiple`.

    Falls back to `total` (full-extent block, always legal) if none exists.
    """
    if total <= target:
        return total
    for t in range(target, multiple - 1, -1):
        if total % t == 0 and t % multiple == 0:
            return t
    # TODO(synk): pad the extent to a tile multiple instead of falling back to
    # a full-extent block (a prime-ish T silently loses tiling + causal skip).
    return total


def _lane_view(x, n):
    """View a lane-dense (rows, NUM_LANES) value (equal across lanes) as n lanes."""
    lanes = x.shape[-1]
    if n == lanes:
        return x
    if n % lanes == 0:
        return jnp.tile(x, (1, n // lanes))
    return x[:, :1]  # (rows, 1): broadcast fallback for small shapes


# ---------------------------------------------------------------------------
# Fused linear: out = x @ W + b
# ---------------------------------------------------------------------------
def _linear_kernel(x_ref, w_ref, b_ref, o_ref):
    acc = jnp.dot(x_ref[...], w_ref[...], preferred_element_type=jnp.float32)
    o_ref[...] = (acc + b_ref[...]).astype(o_ref.dtype)


def _linear_tiles(M, K, N, itemsize, budget=20 * 1024 * 1024):
    """Pick (tm, tn) so the double-buffered working set stays under `budget`."""
    for tm_target in (512, 256, 128, 64, 32, 16, 8):
        tm = _pick_tile(M, tm_target, 8)
        for tn_target in (N, 1024, 512, 256, 128):
            tn = _pick_tile(N, tn_target, 128)
            # x tile + W tile + out tile (double buffered) + f32 bias tile.
            fp = 2 * itemsize * (tm * K + K * tn + tm * tn) + 2 * 4 * tn
            if fp <= budget:
                return tm, tn
    # TODO(synk): add a K reduction grid axis (f32 accumulator scratch) for
    # very large contraction dims instead of always loading the full K.
    return _pick_tile(M, 8, 8), _pick_tile(N, 128, 128)


def _linear(x2d, w, b):
    """x2d: (M, K), w: (K, N) (same dtype as x2d), b: (1, N) f32 -> (M, N)."""
    M, K = x2d.shape
    _, N = w.shape
    itemsize = jnp.dtype(x2d.dtype).itemsize
    tm, tn = _linear_tiles(M, K, N, itemsize)
    grid = (M // tm, N // tn)
    cost = pl.CostEstimate(
        flops=2 * M * K * N,
        transcendentals=0,
        bytes_accessed=itemsize * (M * K + K * N + M * N) + 4 * N,
    )
    return pl.pallas_call(
        _linear_kernel,
        out_shape=jax.ShapeDtypeStruct((M, N), x2d.dtype),
        grid_spec=pltpu.PrefetchScalarGridSpec(
            num_scalar_prefetch=0,
            grid=grid,
            in_specs=[
                pl.BlockSpec((tm, K), lambda i, j: (i, 0)),   # x row tile
                # When tn == N this block index never changes, so W is DMA'd
                # once and stays resident instead of re-streaming per row tile.
                pl.BlockSpec((K, tn), lambda i, j: (0, j)),
                pl.BlockSpec((1, tn), lambda i, j: (0, j)),   # f32 bias
            ],
            out_specs=pl.BlockSpec((tm, tn), lambda i, j: (i, j)),
        ),
        compiler_params=pltpu.CompilerParams(
            dimension_semantics=("parallel", "parallel"),
            vmem_limit_bytes=32 * 1024 * 1024),
        cost_estimate=cost,
    )(x2d, w, b)


# ---------------------------------------------------------------------------
# Flash attention (causal, online softmax, triangular block schedule)
# ---------------------------------------------------------------------------
def _flash_attn_kernel(qi_ref, ki_ref, q_ref, k_ref, v_ref, o_ref,
                       m_sc, l_sc, acc_sc, *, scale, exact):
    t = pl.program_id(1)
    qi = qi_ref[t]
    ki = ki_ref[t]
    tq = q_ref.shape[1]
    tk = k_ref.shape[1]
    hd = q_ref.shape[2]

    @pl.when(ki == 0)                 # first kv block of this q row
    def _init():
        m_sc[...] = jnp.full_like(m_sc, -jnp.inf)
        l_sc[...] = jnp.zeros_like(l_sc)
        acc_sc[...] = jnp.zeros_like(acc_sc)

    def _process(apply_mask):
        q = q_ref[0]                                    # (tq, hd)
        k = k_ref[0]                                    # (tk, hd)
        # Contract on hd of both operands: no K-tile transpose materialized.
        s = lax.dot_general(q, k, (((1,), (1,)), ((), ())),
                            preferred_element_type=jnp.float32) * scale
        if apply_mask:
            # Only the diagonal block is masked, and there q_start == k_start,
            # so a purely local row >= col comparison suffices.
            rows = lax.broadcasted_iota(jnp.int32, (tq, tk), 0)
            cols = lax.broadcasted_iota(jnp.int32, (tq, tk), 1)
            s = jnp.where(rows >= cols, s, -1e30)       # large finite, NaN-safe
        m_prev = m_sc[...]                              # (tq, 128) lane-dense
        l_prev = l_sc[...]
        m_cur = jnp.max(s, axis=-1, keepdims=True)      # (tq, 1)
        m_next = jnp.maximum(m_prev, m_cur)             # (tq, 128)
        alpha = jnp.exp(m_prev - m_next)                # f32 softmax math
        p = jnp.exp(s - _lane_view(m_next, tk))         # (tq, tk)
        l_sc[...] = alpha * l_prev + jnp.sum(p, axis=-1, keepdims=True)
        acc_sc[...] = (_lane_view(alpha, hd) * acc_sc[...]
                       + jnp.dot(p.astype(v_ref.dtype), v_ref[0],
                                 preferred_element_type=jnp.float32))
        m_sc[...] = m_next

    @pl.when(qi == ki)
    def _diag_block():
        _process(apply_mask=True)

    @pl.when(qi != ki)
    def _full_block():
        _process(apply_mask=False)

    @pl.when(ki == qi)                # diagonal block is the last of this q row
    def _finalize():
        l = l_sc[...]
        if exact:
            out = acc_sc[...] / _lane_view(l, hd)
        else:
            out = acc_sc[...] * _lane_view(pl.reciprocal(l, approx=True), hd)
        o_ref[0] = out.astype(o_ref.dtype)


def _flash_attention(q, k, v):
    """q, k, v: (B*H, T, hd) -> (B*H, T, hd), causal."""
    BH, T, hd = q.shape
    scale = 1.0 / math.sqrt(hd)
    exact = jnp.dtype(q.dtype) == jnp.dtype(jnp.float32)
    tq = _pick_tile(T, 512, 8)
    tk = tq                           # diagonal / skip logic assumes tq == tk
    nq = T // tq

    # Lower-triangular (q-tile, kv-tile) schedule via scalar prefetch: fully
    # masked blocks are never visited (no DMA, no grid-step overhead).
    pairs = [(i, j) for i in range(nq) for j in range(i + 1)]
    qi_map = jnp.asarray([p[0] for p in pairs], dtype=jnp.int32)
    ki_map = jnp.asarray([p[1] for p in pairs], dtype=jnp.int32)
    n_tri = len(pairs)

    itemsize = jnp.dtype(q.dtype).itemsize
    cost = pl.CostEstimate(
        flops=4 * BH * n_tri * tq * tk * hd,            # qk^T + p@v over visited blocks
        transcendentals=BH * n_tri * tq * tk,
        bytes_accessed=itemsize * 4 * BH * T * hd,
    )
    kernel = functools.partial(_flash_attn_kernel, scale=scale, exact=exact)
    return pl.pallas_call(
        kernel,
        out_shape=jax.ShapeDtypeStruct((BH, T, hd), q.dtype),
        grid_spec=pltpu.PrefetchScalarGridSpec(
            num_scalar_prefetch=2,
            grid=(BH, n_tri),
            in_specs=[
                pl.BlockSpec((1, tq, hd), lambda b, t, qi, ki: (b, qi[t], 0)),  # Q
                pl.BlockSpec((1, tk, hd), lambda b, t, qi, ki: (b, ki[t], 0)),  # K
                pl.BlockSpec((1, tk, hd), lambda b, t, qi, ki: (b, ki[t], 0)),  # V
            ],
            out_specs=pl.BlockSpec((1, tq, hd), lambda b, t, qi, ki: (b, qi[t], 0)),
            scratch_shapes=[
                pltpu.VMEM((tq, NUM_LANES), jnp.float32),   # running max (lane-dense)
                pltpu.VMEM((tq, NUM_LANES), jnp.float32),   # running denom (lane-dense)
                pltpu.VMEM((tq, hd), jnp.float32),          # running output acc
            ],
        ),
        compiler_params=pltpu.CompilerParams(
            dimension_semantics=("parallel", "arbitrary")),
        cost_estimate=cost,
    )(qi_map, ki_map, q, k, v)


# ---------------------------------------------------------------------------
# Full forward pass (matches PyTorch SelfAttention.forward)
# ---------------------------------------------------------------------------
def self_attention(x, w_qkv, b_qkv, w_proj, b_proj, *, n_head,
                   compute_dtype=jnp.bfloat16):
    """x: (B, T, C). Weights stored as (in, out); biases as (1, out)."""
    B, T, C = x.shape
    hd = C // n_head
    out_dtype = x.dtype

    # Pre-cast once in HBM: halves DMA bytes / VMEM tiles vs in-kernel casts.
    xc = x.astype(compute_dtype)
    wq = w_qkv.astype(compute_dtype)
    wp = w_proj.astype(compute_dtype)
    bq = b_qkv.astype(jnp.float32)          # biases stay f32 (added to f32 acc)
    bp = b_proj.astype(jnp.float32)

    # QKV projection.
    qkv = _linear(xc.reshape(B * T, C), wq, bq)                   # (B*T, 3C)

    # Head split: XLA layout op in the wrapper (see header comment).
    # TODO(synk): pack 2 heads per attention block (lane width 128) when hd < 128.
    qkv = qkv.reshape(B, T, 3, n_head, hd).transpose(2, 0, 3, 1, 4)  # (3,B,H,T,hd)
    q = qkv[0].reshape(B * n_head, T, hd)
    k = qkv[1].reshape(B * n_head, T, hd)
    v = qkv[2].reshape(B * n_head, T, hd)

    # Causal flash attention.
    y = _flash_attention(q, k, v)                                 # (B*H, T, hd)

    # Head merge back to a lane-dense (B*T, C) slab, then output projection.
    y = y.reshape(B, n_head, T, hd).transpose(0, 2, 1, 3).reshape(B * T, C)
    out = _linear(y, wp, bp)                                      # (B*T, C)
    return out.reshape(B, T, C).astype(out_dtype)


# ---------------------------------------------------------------------------
# Plain-JAX reference (replicates F.scaled_dot_product_attention(is_causal=True))
# ---------------------------------------------------------------------------
def _reference(x, w_qkv, b_qkv, w_proj, b_proj, n_head):
    B, T, C = x.shape
    hd = C // n_head
    qkv = x @ w_qkv + b_qkv[0]
    q, k, v = jnp.split(qkv, 3, axis=-1)

    def heads(t):
        return t.reshape(B, T, n_head, hd).transpose(0, 2, 1, 3)

    q, k, v = heads(q), heads(k), heads(v)
    scores = jnp.einsum("bhqd,bhkd->bhqk", q, k) / math.sqrt(hd)
    mask = jnp.tril(jnp.ones((T, T), dtype=bool))
    scores = jnp.where(mask, scores, -jnp.inf)
    p = jax.nn.softmax(scores, axis=-1)
    y = jnp.einsum("bhqk,bhkd->bhqd", p, v)
    y = y.transpose(0, 2, 1, 3).reshape(B, T, C)
    return y @ w_proj + b_proj[0]


if __name__ == "__main__":
    # Small config consistent with the module: C % n_head == 0.
    B, T, C, n_head = 2, 8, 32, 4

    key = jax.random.PRNGKey(0)
    kx, k1, k2, k3, k4 = jax.random.split(key, 5)

    x = jax.random.normal(kx, (B, T, C), dtype=jnp.float32)

    bound = 1.0 / math.sqrt(C)
    w_qkv = jax.random.uniform(k1, (C, 3 * C), jnp.float32, -bound, bound)
    b_qkv = jax.random.uniform(k2, (1, 3 * C), jnp.float32, -bound, bound)
    w_proj = jax.random.uniform(k3, (C, C), jnp.float32, -bound, bound)
    b_proj = jax.random.uniform(k4, (1, C), jnp.float32, -bound, bound)

    ref = _reference(x, w_qkv, b_qkv, w_proj, b_proj, n_head)

    # Exact-precision path (f32 operands end to end) — tight correctness check.
    out_f32 = self_attention(x, w_qkv, b_qkv, w_proj, b_proj,
                             n_head=n_head, compute_dtype=jnp.float32)
    out_f32 = jax.block_until_ready(out_f32)
    assert out_f32.shape == (B, T, C)
    assert jnp.allclose(out_f32, ref, atol=1e-4, rtol=1e-4), "f32 mismatch vs reference"

    # Performance path (bf16 operands in HBM, f32 accumulation / f32 softmax).
    out_bf16 = self_attention(x, w_qkv, b_qkv, w_proj, b_proj,
                              n_head=n_head, compute_dtype=jnp.bfloat16)
    out_bf16 = jax.block_until_ready(out_bf16)
    assert jnp.allclose(out_bf16, ref, atol=5e-2, rtol=5e-2), "bf16 mismatch vs reference"

    print("KERNEL_OK")
</pallas_src>

<mosaic_0001>
module attributes {stable_mosaic.version = 11 : i64} {
  func.func @_linear_kernel(%arg0: i32, %arg1: i32, %arg2: memref<16x32xf32, #tpu.memory_space<vmem>>, %arg3: memref<32x96xf32, #tpu.memory_space<vmem>>, %arg4: memref<1x96xf32, #tpu.memory_space<vmem>>, %arg5: memref<16x96xf32, #tpu.memory_space<vmem>>) attributes {dimension_semantics = [#tpu.dimension_semantics<parallel>, #tpu.dimension_semantics<parallel>], iteration_bounds = array<i64: 1, 1>, scalar_prefetch = 0 : i64, scratch_operands = 0 : i64, tpu.core_type = #tpu.core_type<tc>, window_params = [{transform_indices = @transform_0, window_bounds = array<i64: 16, 32>}, {transform_indices = @transform_1, window_bounds = array<i64: 32, 96>}, {transform_indices = @transform_2, window_bounds = array<i64: 1, 96>}, {transform_indices = @transform_3, window_bounds = array<i64: 16, 96>}]} {
    %c0 = arith.constant 0 : index
    %c0_0 = arith.constant 0 : index
    %0 = vector.load %arg2[%c0, %c0_0] : memref<16x32xf32, #tpu.memory_space<vmem>>, vector<16x32xf32>
    %c0_1 = arith.constant 0 : index
    %c0_2 = arith.constant 0 : index
    %1 = vector.load %arg3[%c0_1, %c0_2] : memref<32x96xf32, #tpu.memory_space<vmem>>, vector<32x96xf32>
    %cst = arith.constant dense<0.000000e+00> : vector<16x96xf32>
    %2 = tpu.matmul %0, %1, %cst {dimension_numbers = #tpu.dot_dimension_numbers<[1], [0], [0], [1], [0, 0, 1, 1], [], []>} : vector<16x32xf32>, vector<32x96xf32>, vector<16x96xf32> -> vector<16x96xf32>
    %c0_3 = arith.constant 0 : index
    %c0_4 = arith.constant 0 : index
    %3 = vector.load %arg4[%c0_3, %c0_4] : memref<1x96xf32, #tpu.memory_space<vmem>>, vector<1x96xf32>
    %4 = vector.broadcast %3 : vector<1x96xf32> to vector<16x96xf32>
    %5 = arith.addf %2, %4 : vector<16x96xf32>
    %c0_5 = arith.constant 0 : index
    %c0_6 = arith.constant 0 : index
    %6 = vector.load %arg5[%c0_5, %c0_6] : memref<16x96xf32, #tpu.memory_space<vmem>>, vector<16x96xf32>
    tpu.vector_store %arg5[%c0_5, %c0_6], %5 {strides = array<i32>} : memref<16x96xf32, #tpu.memory_space<vmem>>, vector<16x96xf32>,
    return
  }
  func.func @transform_0(%arg0: i32, %arg1: i32) -> (i32, i32) {
    %c0_i32 = arith.constant 0 : i32
    %c0_i32_0 = arith.constant 0 : i32
    return %arg0, %c0_i32 : i32, i32
  }
  func.func @transform_1(%arg0: i32, %arg1: i32) -> (i32, i32) {
    %c0_i32 = arith.constant 0 : i32
    %c0_i32_0 = arith.constant 0 : i32
    return %c0_i32, %arg1 : i32, i32
  }
  func.func @transform_2(%arg0: i32, %arg1: i32) -> (i32, i32) {
    %c0_i32 = arith.constant 0 : i32
    %c0_i32_0 = arith.constant 0 : i32
    return %c0_i32, %arg1 : i32, i32
  }
  func.func @transform_3(%arg0: i32, %arg1: i32) -> (i32, i32) {
    %c0_i32 = arith.constant 0 : i32
    return %arg0, %arg1 : i32, i32
  }
}

</mosaic_0001>

<llo_original>
// kernel: tpu_custom_call.1
$region0: #{tpu_custom_call.1}
  #allocation0 [shape = 'u32[]', space=smem, size = 0x4, offset = 0x4, fixed_abs, tag = 'smem constant byte address 0x4 - core index']
  #allocation1 [shape = 'u32[144,128]{1,0:T(1,128)}', space=vmem, size = 0x12000, scoped, tag = 'internal scratch']
  %s0 = inlined_call_operand.hbm [shape: f32[16,32], index: 0, kind: input, shape index: {}]
  %s1 = inlined_call_operand.hbm [shape: f32[32,96], index: 1, kind: input, shape index: {}]
  %s2 = inlined_call_operand.vmem [shape: f32[1,96], index: 2, kind: input, shape index: {}]
  %s3 = inlined_call_operand.hbm [shape: f32[16,96], index: 3, kind: output, shape index: {}]
  %s4 = sld [smem:[#allocation0]]
  $region30: #{tpu_custom_call.1} parent=0
    _
  %s6 = ssub.s32 1, %s4
  %s7 = scalar_select 0, %s6, %s4
  $region1: #{tpu_custom_call.1} parent=0
    #allocation2 [shape = 'u8[8192]{0}', space=vmem, size = 0x2000, scoped, tag = 'input window, operand 0, single buffered']
    #allocation3 [shape = 's32[1]{0}', space=sflag, size = 0x4, scoped, tag = 'scoped memory for tpu_custom_call.1']
    #allocation4 [shape = 's32[1]{0}', space=sflag, size = 0x4, scoped, tag = 'scoped memory for tpu_custom_call.1']
    #allocation5 [shape = 'u8[16384]{0}', space=vmem, size = 0x4000, scoped, tag = 'input window, operand 1, single buffered']
    #allocation6 [shape = 's32[1]{0}', space=sflag, size = 0x4, scoped, tag = 'scoped memory for tpu_custom_call.1']
    #allocation7 [shape = 'u8[8192]{0}', space=vmem, size = 0x2000, scoped, tag = 'output window, operand 0, single buffered']
    %8 = vsyncpa [#allocation3], 0
    %9 = vsyncpa [#allocation6], 0
    %10 = vsyncpa [#allocation4], 0
    // Predicated region
    $region2: #{tpu_custom_call.1} parent=1 // pred_check
      _
    $region3: #{tpu_custom_call.1} parent=1 // pred_check_branch
      %12 = sbr.rel (0) target = $region5
    $region4: #{tpu_custom_call.1} parent=1 // pred_region
      %s14 = ssub.s32 256, 256
      %15 = vsyncadd [#allocation3], %s14
      %s16 = sshll.u32 [#allocation2], 4
      %s17 = int_to_ptr.vmem [resolvable:$true] %s16
      %22 = dma.hbm_to_vmem [thread:$0]  %s0, 256, %s17, [#allocation3], 128, 128, 8
    $region5: #{tpu_custom_call.1} parent=1 // pred_fallthru
      _
    // Predicated region
    $region6: #{tpu_custom_call.1} parent=1 // pred_check
      _
    $region7: #{tpu_custom_call.1} parent=1 // pred_check_branch
      %24 = sbr.rel (0) target = $region9
    $region8: #{tpu_custom_call.1} parent=1 // pred_region
      %s26 = ssub.s32 512, 512
      %27 = vsyncadd [#allocation6], %s26
      %s28 = sshll.u32 [#allocation5], 4
      %s29 = int_to_ptr.vmem [resolvable:$true] %s28
      %34 = dma.hbm_to_vmem [thread:$0]  %s1, 512, %s29, [#allocation6], 128, 128, 8
    $region9: #{tpu_custom_call.1} parent=1 // pred_fallthru
      _
    // Predicated region
    $region10: #{tpu_custom_call.1} parent=1 // pred_check
      _
    $region11: #{tpu_custom_call.1} parent=1 // pred_check_branch
      %36 = sbr.rel (0) target = $region13
    $region12: #{tpu_custom_call.1} parent=1 // pred_region
      _
    $region13: #{tpu_custom_call.1} parent=1 // pred_fallthru
      _
    // Predicated region
    $region14: #{tpu_custom_call.1} parent=1 // pred_check
      _
    $region15: #{tpu_custom_call.1} parent=1 // pred_check_branch
      %38 = sbr.rel (0) target = $region17
    $region16: #{tpu_custom_call.1} parent=1 // pred_region
      %39 = dma.done [#allocation3], 256
    $region17: #{tpu_custom_call.1} parent=1 // pred_fallthru
      _
    // Predicated region
    $region18: #{tpu_custom_call.1} parent=1 // pred_check
      _
    $region19: #{tpu_custom_call.1} parent=1 // pred_check_branch
      %41 = sbr.rel (0) target = $region21
    $region20: #{tpu_custom_call.1} parent=1 // pred_region
      %42 = dma.done [#allocation6], 512
    $region21: #{tpu_custom_call.1} parent=1 // pred_fallthru
      _
    %v43 = vld [vmem:[#allocation2] sm:$0xff]
    %v44 = vld [vmem:[#allocation2 + $0x8] sm:$0xff]
    %v45 = vld [vmem:[#allocation5] sm:$0xff]
    %v46 = vld [vmem:[#allocation5 + $0x8] sm:$0xff]
    %v47 = vld [vmem:[#allocation5 + $0x10] sm:$0xff]
    %v48 = vld [vmem:[#allocation5 + $0x18] sm:$0xff]
    %v49 = vld [vmem:[%s2] sm:$0x1]
    %v51 = vlaneseq
    %v52 = vshrl.u32 %v51, 7
    %v53 = vsub.s32 0, %v52
    %v54 = vrot.slane %v49, %v53
    %vm56 = vcmask 261120
    %v58 = vsel %vm56, %v43, 0
    %v61 = vsel %vm56, %v44, 0
    %63 = vmatprep.subr.mxu0 0.0
    %64 = vmatpush1.msra.mxu0 0.0
    %65 = vmatprep.subr.mxu0 0.0
    %66 = vmatpush1.msra.mxu0 0.0
    %67 = vmatprep.subr.mxu0 0.0
    %68 = vmatpush1.msra.mxu0 0.0
    %69 = vmatprep.subr.mxu0 0.0
    %70 = vmatpush1.msra.mxu0 0.0
    %71 = vmatprep.subr.mxu0 0.0
    %72 = vmatpush1.msra.mxu0 0.0
    %73 = vmatprep.subr.mxu0 0.0
    %74 = vmatpush1.msra.mxu0 0.0
    %75 = vmatprep.subr.mxu0 0.0
    %76 = vmatpush1.msra.mxu0 0.0
    %77 = vmatprep.subr.mxu0 0.0
    %78 = vmatpush1.msra.mxu0 0.0
    %79 = vmatprep.subr.mxu0 0.0
    %80 = vmatpush1.msra.mxu0 0.0
    %81 = vmatprep.subr.mxu0 0.0
    %82 = vmatpush1.msra.mxu0 0.0
    %83 = vmatprep.subr.mxu0 0.0
    %84 = vmatpush1.msra.mxu0 0.0
    %85 = vmatprep.subr.mxu0 0.0
    %86 = vmatpush1.msra.mxu0 0.0
    %87 = vmatprep.subr.mxu0 0.0
    %88 = vmatpush1.msra.mxu0 %v48
    %89 = vmatprep.subr.mxu0 0.0
    %90 = vmatpush1.msra.mxu0 %v47
    %91 = vmatprep.subr.mxu0 0.0
    %92 = vmatpush1.msra.mxu0 %v46
    %93 = vmatprep.subr.mxu0 0.0
    %94 = vmatpush1.msra.mxu0 %v45
    %95 = vmatprep.subr.mxu0 0.0
    %96 = vmatpush2.msra.mxu0 0.0
    %97 = vmatprep.subr.mxu0 0.0
    %98 = vmatpush2.msra.mxu0 0.0
    %99 = vmatprep.subr.mxu0 0.0
    %100 = vmatpush2.msra.mxu0 0.0
    %101 = vmatprep.subr.mxu0 0.0
    %102 = vmatpush2.msra.mxu0 0.0
    %103 = vmatprep.subr.mxu0 0.0
    %104 = vmatpush2.msra.mxu0 0.0
    %105 = vmatprep.subr.mxu0 0.0
    %106 = vmatpush2.msra.mxu0 0.0
    %107 = vmatprep.subr.mxu0 0.0
    %108 = vmatpush2.msra.mxu0 0.0
    %109 = vmatprep.subr.mxu0 0.0
    %110 = vmatpush2.msra.mxu0 0.0
    %111 = vmatprep.subr.mxu0 0.0
    %112 = vmatpush2.msra.mxu0 0.0
    %113 = vmatprep.subr.mxu0 0.0
    %114 = vmatpush2.msra.mxu0 0.0
    %115 = vmatprep.subr.mxu0 0.0
    %116 = vmatpush2.msra.mxu0 0.0
    %117 = vmatprep.subr.mxu0 0.0
    %118 = vmatpush2.msra.mxu0 0.0
    %119 = vmatprep.subr.mxu0 0.0
    %120 = vmatpush2.msra.mxu0 0.0
    %121 = vmatprep.subr.mxu0 0.0
    %122 = vmatpush2.msra.mxu0 0.0
    %123 = vmatprep.subr.mxu0 0.0
    %124 = vmatpush2.msra.mxu0 0.0
    %125 = vmatprep.subr.mxu0 0.0
    %126 = vmatpush2.msra.mxu0 0.0
    %127 = vmatprep.mubr.f32.mxu0 0.0
    %128 = vmatmul.mubr.f32.gmra.mxu0 %v58
    %v129 = vpop.f32.mrf.mxu0
    %v130 = vadd.f32 %v54, %v129
    %v131 = vpop.f32.mrf.mxu0
    %132 = vmatprep.mubr.f32.mxu0 0.0
    %133 = vmatmul.mubr.f32.gmra.mxu0 %v61
    %v134 = vpop.f32.mrf.mxu0
    %v135 = vadd.f32 %v54, %v134
    %v136 = vpop.f32.mrf.mxu0
    %137 = vdwg.mxu0
    %vm138 = vcmask 785408
    %139 = vst.msk [vmem:[#allocation7] sm:$0xff] %vm138, %v130
    %140 = vst.msk [vmem:[#allocation7 + $0x8] sm:$0xff] %vm138, %v135
    // Predicated region
    $region22: #{tpu_custom_call.1} parent=1 // pred_check
      _
    $region23: #{tpu_custom_call.1} parent=1 // pred_check_branch
      %142 = sbr.rel (0) target = $region25
    $region24: #{tpu_custom_call.1} parent=1 // pred_region
      %s144 = ssub.s32 256, 256
      %145 = vsyncadd [#allocation4], %s144
      %s146 = sshll.u32 [#allocation7], 4
      %s147 = int_to_ptr.vmem [resolvable:$true] %s146
      %152 = dma.vmem_to_hbm [thread:$0]  %s147, 256, %s3, [#allocation4], 128, 128, 8
    $region25: #{tpu_custom_call.1} parent=1 // pred_fallthru
      _
    // Predicated region
    $region26: #{tpu_custom_call.1} parent=1 // pred_check
      _
    $region27: #{tpu_custom_call.1} parent=1 // pred_check_branch
      %154 = sbr.rel (0) target = $region29
    $region28: #{tpu_custom_call.1} parent=1 // pred_region
      %155 = dma.done [#allocation4], 256
    $region29: #{tpu_custom_call.1} parent=1 // pred_fallthru
      _
    %156 = vsyncpa [#allocation3], 1
    %157 = vsyncpa [#allocation6], 1
    %158 = vsyncpa [#allocation4], 1

</llo_original>
